<compile_context>
chip_gen: v6e
topology: v6e:2x2x1
jax: 0.10.0
libtpu: 0.0.40
codegen_flags: <defaults>
</compile_context>

<pallas_src>
import math

import numpy as np
import jax
import jax.numpy as jnp
from jax.experimental import pallas as pl
from jax.experimental.pallas import tpu as pltpu

_LANE = 128


def _round_up(x, m):
    return ((x + m - 1) // m) * m


def _tile(dim, tmax):
    """(tile, padded_dim). Small dims -> one full-extent block, no padding."""
    if dim <= tmax:
        return dim, dim
    return tmax, _round_up(dim, tmax)


def _tpu_config():
    """Generation-aware tile caps + scoped-VMEM limit.

    v7x : 64 MiB physical VMEM, 2 TensorCores -> node tile 256 (>=2 parallel
          output tiles for real batches), scoped VMEM capped at 48 MiB.
    v6e : 128 MiB physical -> node tile 512, raise scoped VMEM to 64 MiB.
    v5e : 128 MiB physical (16 MiB default scope) -> same tiles fit easily.
    """
    vmem_cap = 128 << 20
    try:
        vmem_cap = int(getattr(pltpu.get_tpu_info(), "vmem_capacity_bytes", vmem_cap))
    except Exception:
        pass
    if vmem_cap <= (64 << 20):
        return {"tm": 256, "tu": 1024, "vmem_limit": 48 << 20}
    return {"tm": 512, "tu": 1024, "vmem_limit": 64 << 20}


def xavier_uniform(key, shape):
    fan_in, fan_out = shape
    bound = math.sqrt(6.0 / (fan_in + fan_out))
    return jax.random.uniform(key, shape, jnp.float32, -bound, bound)


# ---------------------------------------------------------------------------
# Label classifier:  scores = x @ W_clf + b   (f32, N padded to 128 lanes)
# ---------------------------------------------------------------------------
def _clf_kernel(x_ref, w_ref, b_ref, o_ref):
    o_ref[...] = (jnp.dot(x_ref[...], w_ref[...],
                          preferred_element_type=jnp.float32) + b_ref[...])


def pallas_label_clf(x, w_pad, b_pad, *, tm_max, vmem_limit):
    M, F = x.shape
    Fw, Np = w_pad.shape
    assert F == Fw and Np % _LANE == 0
    tm, Mp = _tile(M, tm_max)
    if Mp != M:  # only for batches larger than one node tile (data-dependent)
        x = jnp.pad(x, ((0, Mp - M), (0, 0)))
    out = pl.pallas_call(
        _clf_kernel,
        out_shape=jax.ShapeDtypeStruct((Mp, Np), jnp.float32),
        grid=(Mp // tm,),
        in_specs=[pl.BlockSpec((tm, F), lambda i: (i, 0)),
                  pl.BlockSpec((F, Np), lambda i: (0, 0)),
                  pl.BlockSpec((1, Np), lambda i: (0, 0))],
        out_specs=pl.BlockSpec((tm, Np), lambda i: (i, 0)),
        compiler_params=pltpu.CompilerParams(
            dimension_semantics=("parallel",), vmem_limit_bytes=vmem_limit),
    )(x, w_pad, b_pad)
    return out[:M]


# ---------------------------------------------------------------------------
# Fused intra + inter aggregation (single launch):
#   combined = relu( self_feats @ W_self + relu(mean(mask @ E) @ W_intra) @ W_r1 )
# ---------------------------------------------------------------------------
def _fused_inter_kernel(mask_ref, e_ref, invdeg_ref, wi_ref, sf_ref, ws_ref,
                        wr_ref, o_ref, acc_ref):
    u = pl.program_id(1)

    @pl.when(u == 0)
    def _():
        acc_ref[...] = jnp.zeros_like(acc_ref)

    # Heavy matmul: neighbor sum-aggregation, bf16 operands, f32 accumulation.
    acc_ref[...] += jnp.dot(mask_ref[...], e_ref[...],
                            preferred_element_type=jnp.float32)

    @pl.when(u == pl.num_programs(1) - 1)
    def _():
        # mean over sampled neighbors (exact binary mask + f32 1/deg multiply)
        agg = acc_ref[...] * invdeg_ref[...]
        # r1_feats = relu((mean agg) @ W_intra) -- stays in VMEM/vregs, never
        # stored to HBM with a narrow (embed_dim) lane dim; accumulator stays f32.
        h = jnp.maximum(
            jnp.dot(agg, wi_ref[...], preferred_element_type=jnp.float32), 0.0)
        # combined = relu(self_feats @ W_self + r1_feats @ W_r1)
        comb = jnp.dot(sf_ref[...].astype(jnp.float32), ws_ref[...],
                       preferred_element_type=jnp.float32)
        comb = comb + jnp.dot(h, wr_ref[...], preferred_element_type=jnp.float32)
        o_ref[...] = jnp.maximum(comb, 0.0).astype(o_ref.dtype)


def fused_inter_agg(mask, neigh_feats, inv_deg, w_intra, self_feats,
                    w_self_pad, w_r1_pad, *, tm_max, tu_max, vmem_limit):
    M, U = mask.shape
    U2, F = neigh_feats.shape
    F2, D = w_intra.shape
    Fp, Dp = w_self_pad.shape
    assert U == U2 and F == F2 == Fp and w_r1_pad.shape == (D, Dp)
    assert self_feats.shape == (M, F) and inv_deg.shape == (M, 1)

    tm, Mp = _tile(M, tm_max)
    tu, Up = _tile(U, tu_max)

    # VMEM size guard (review concern: full-extent F/D blocks have no guard).
    need = (2 * tm * tu * 2 + 2 * tu * F * 2 + 2 * tm * F * 2 + 2 * tm * 4
            + 2 * (F * D + F * Dp + D * Dp) * 4 + 2 * tm * Dp * 4 + tm * F * 4)
    if need > vmem_limit:
        raise ValueError(
            f"fused_inter_agg working set (~{need >> 20} MiB) exceeds the scoped "
            f"VMEM budget ({vmem_limit >> 20} MiB); shrink the feat/embed dims "
            f"or tile them explicitly.")

    mask_b = jnp.asarray(mask, jnp.bfloat16)   # binary mask -> exact in bf16
    inv_deg = jnp.asarray(inv_deg, jnp.float32)
    if Mp != M:
        mask_b = jnp.pad(mask_b, ((0, Mp - M), (0, 0)))
        self_feats = jnp.pad(self_feats, ((0, Mp - M), (0, 0)))
        inv_deg = jnp.pad(inv_deg, ((0, Mp - M), (0, 0)))
    if Up != U:
        mask_b = jnp.pad(mask_b, ((0, 0), (0, Up - U)))
        neigh_feats = jnp.pad(neigh_feats, ((0, Up - U), (0, 0)))

    out = pl.pallas_call(
        _fused_inter_kernel,
        out_shape=jax.ShapeDtypeStruct((Mp, Dp), jnp.float32),
        grid=(Mp // tm, Up // tu),
        in_specs=[
            pl.BlockSpec((tm, tu), lambda i, u: (i, u)),   # binary mask (bf16)
            pl.BlockSpec((tu, F), lambda i, u: (u, 0)),    # neighbor feats (bf16)
            pl.BlockSpec((tm, 1), lambda i, u: (i, 0)),    # 1/deg (f32)
            pl.BlockSpec((F, D), lambda i, u: (0, 0)),     # W_intra (f32)
            pl.BlockSpec((tm, F), lambda i, u: (i, 0)),    # self feats (bf16)
            pl.BlockSpec((F, Dp), lambda i, u: (0, 0)),    # W_self (lane-padded)
            pl.BlockSpec((D, Dp), lambda i, u: (0, 0)),    # W_r1  (lane-padded)
        ],
        out_specs=pl.BlockSpec((tm, Dp), lambda i, u: (i, 0)),
        scratch_shapes=[pltpu.VMEM((tm, F), jnp.float32)],
        compiler_params=pltpu.CompilerParams(
            dimension_semantics=("parallel", "arbitrary"),
            vmem_limit_bytes=vmem_limit),
    )(mask_b, neigh_feats, inv_deg, w_intra, self_feats, w_self_pad, w_r1_pad)
    return out  # (Mp, Dp) f32; caller slices [:M, :embed_dim]


# ---------------------------------------------------------------------------
# Modules
# ---------------------------------------------------------------------------
class IntraAgg:
    """Stand-in for the intra-relation aggregator passed to InterAgg1.

    # TODO(synk): the real IntraAgg is a constructor dependency not defined in
    # the InterAgg1 spec; we implement the standard CARE-GNN intra aggregation
    # (score-distance top-k neighbor filtering -> mean aggregation -> relu(Wx)).
    # Per the perf review its two matmuls are fused with the inter combine into
    # InterAgg1's single pallas_call; this class owns the weight and the
    # host-side neighbor sampling / mask construction.
    """

    def __init__(self, features, feat_dim, embed_dim, key, cuda=False):
        self.features = features
        self.feat_dim = feat_dim
        self.embed_dim = embed_dim
        self.cuda = cuda
        # f32 on purpose: the (mask @ E) accumulator stays f32 through the
        # second matmul (review correctness concern about the bf16 cast).
        self.weight = xavier_uniform(key, (feat_dim, embed_dim))

    def sample_and_build_mask(self, to_neighs_list, batch_scores_np,
                              center_scores_np, id_mapping, pos_scores,
                              sample_list):
        # TODO(synk): data-dependent Python set logic kept on host; an on-device
        # top-k + scalar-prefetch gather version is a larger rework.
        samp_neighs, samp_score_diff = [], []
        for i, neighs in enumerate(to_neighs_list):
            rows = np.asarray([id_mapping[x] for x in neighs], np.int64)
            diff = np.abs(batch_scores_np[rows, 0] - center_scores_np[i, 0])
            order = np.argsort(diff, kind="stable")
            num = sample_list[i]
            if len(neighs) > num + 1:
                sel = [neighs[j] for j in order[:num]]
                sel_diff = diff[order[:num]].tolist()
            else:
                sel = list(neighs)
                sel_diff = diff.tolist()
            samp_neighs.append(set(sel))
            samp_score_diff.append(sel_diff)

        unique = sorted(set.union(*samp_neighs))
        col = {u: j for j, u in enumerate(unique)}
        mask = np.zeros((len(to_neighs_list), len(unique)), np.float32)
        for i, sn in enumerate(samp_neighs):
            for u in sn:
                mask[i, col[u]] = 1.0
        # binary mask (exact in bf16); mean normalization happens in-kernel in f32
        inv_deg = (1.0 / np.maximum(mask.sum(axis=1, keepdims=True), 1.0)).astype(np.float32)
        return mask, inv_deg, unique, samp_score_diff


class InterAgg1:
    """JAX/Pallas port of the PyTorch InterAgg1 forward pass."""

    def __init__(self, features, feature_dim, embed_dim, train_pos, adj_lists,
                 intraggs, inter="GNN", cuda=False, key=None):
        # f32 master table (used by the label classifier, keeps argsort-driving
        # scores at reference precision) + a bf16 copy cast ONCE for the
        # bandwidth-heavy aggregation paths.
        self.features = jnp.asarray(features, jnp.float32)
        self.features_bf16 = self.features.astype(jnp.bfloat16)
        self.dropout = 0.6
        self.adj_lists = adj_lists
        self.intra_agg1 = intraggs[0]
        self.intra_agg1.cuda = cuda
        self.embed_dim = embed_dim
        self.feat_dim = feature_dim
        self.cuda = cuda
        self.train_pos = list(train_pos)
        self.thresholds = [0.5]
        self.weights_log = []
        self.thresholds_log = [self.thresholds]
        self.relation_score_log = []
        self.cfg = _tpu_config()

        k_w, k_clf_w, k_clf_b = jax.random.split(key, 3)

        # self.weight: (embed_dim*len(intraggs) + feat_dim, embed_dim), xavier.
        # Split once into the self-feature and r1-feature halves (fuses away the
        # torch.cat) and zero-pad the output columns to 128 lanes (lane-dense
        # stores); padded columns stay exactly 0 after relu and are sliced off.
        d_pad = _round_up(max(embed_dim, _LANE), _LANE)
        self._d_pad = d_pad
        w_full = xavier_uniform(
            k_w, (embed_dim * len(intraggs) + feature_dim, embed_dim))
        self.w_self = jnp.pad(w_full[:feature_dim],
                              ((0, 0), (0, d_pad - embed_dim)))
        self.w_r1 = jnp.pad(w_full[feature_dim:feature_dim + embed_dim],
                            ((0, 0), (0, d_pad - embed_dim)))

        # label_clf = nn.Linear(feat_dim, 2): y = x @ W^T + b (stored
        # pre-transposed, N zero-padded to 128 lanes once at init).
        bound = 1.0 / math.sqrt(feature_dim)
        clf_w = jax.random.uniform(k_clf_w, (feature_dim, 2), jnp.float32, -bound, bound)
        clf_b = jax.random.uniform(k_clf_b, (2,), jnp.float32, -bound, bound)
        self.clf_w = jnp.pad(clf_w, ((0, 0), (0, _LANE - 2)))
        self.clf_b = jnp.pad(clf_b.reshape(1, 2), ((0, 0), (0, _LANE - 2)))

    def forward(self, nodes, labels, train_flag=True):
        nodes = list(nodes)
        to_neighs = []
        for adj_list in self.adj_lists:
            to_neighs.append([set(adj_list[int(node)]) for node in nodes])

        unique_nodes = sorted(set.union(*to_neighs[0]))
        id_mapping = {nid: i for i, nid in enumerate(unique_nodes)}
        U = len(unique_nodes)

        # One gather (unique-neighbor ids + train_pos ids concatenated on host)
        # and ONE classifier launch for both batch and pos scores.
        idx = np.concatenate([np.asarray(unique_nodes, np.int32),
                              np.asarray(self.train_pos, np.int32)])
        clf_in = self.features[jnp.asarray(idx, jnp.int32)]
        all_scores = pallas_label_clf(clf_in, self.clf_w, self.clf_b,
                                      tm_max=self.cfg["tm"],
                                      vmem_limit=self.cfg["vmem_limit"])
        batch_scores = all_scores[:U, :2]
        pos_scores = all_scores[U:, :2]

        center_rows = np.asarray([id_mapping[int(v)] for v in nodes], np.int32)
        center_scores = batch_scores[jnp.asarray(center_rows)]

        r1_list = [sorted(tn) for tn in to_neighs[0]]
        r1_sample_num_list = [math.ceil(len(neighs) * self.thresholds[0])
                              for neighs in r1_list]

        # TODO(synk): single device->host sync for the score-driven neighbor
        # top-k / sparse mask build; moving it on-device would remove this
        # serialization point but is beyond this port.
        scores_np = np.asarray(batch_scores)
        center_np = scores_np[center_rows]
        mask, inv_deg, r1_unique, r1_scores = self.intra_agg1.sample_and_build_mask(
            r1_list, scores_np, center_np, id_mapping, pos_scores,
            r1_sample_num_list)

        neigh_feats = self.features_bf16[jnp.asarray(r1_unique, jnp.int32)]
        self_feats = self.features_bf16[jnp.asarray(nodes, jnp.int32)]

        # Single fused launch: intra aggregation + inter combine; r1_feats and
        # cat_feats never touch HBM, output is stored lane-dense (128 cols).
        out = fused_inter_agg(mask, neigh_feats, inv_deg, self.intra_agg1.weight,
                              self_feats, self.w_self, self.w_r1,
                              tm_max=self.cfg["tm"], tu_max=self.cfg["tu"],
                              vmem_limit=self.cfg["vmem_limit"])

        n = len(nodes)
        # combined = relu(cat(self_feats, r1_feats) @ W).T ; the slice/transpose
        # is a cheap XLA pass on the small (n, embed) result (the unamortized
        # in-kernel transpose was dropped per review).
        combined = out[:n, :self.embed_dim].T
        return combined, center_scores


if __name__ == "__main__":
    key = jax.random.PRNGKey(0)
    k_feat, k_intra, k_inter = jax.random.split(key, 3)

    num_nodes = 40
    feat_dim = 32
    embed_dim = 32
    batch_nodes = list(range(8))

    rng = np.random.default_rng(0)
    labels = rng.integers(0, 2, size=len(batch_nodes)).tolist()

    # synthetic single-relation adjacency (self-loop + random neighbors)
    adj_r1 = {}
    for v in range(num_nodes):
        nbrs = set(int(u) for u in rng.integers(0, num_nodes, size=6))
        nbrs.add(v)
        adj_r1[v] = nbrs
    adj_lists = [adj_r1]
    train_pos = [1, 3, 5]

    features = jax.random.normal(k_feat, (num_nodes, feat_dim), jnp.float32)

    intra1 = IntraAgg(features, feat_dim, embed_dim, k_intra, cuda=False)
    model = InterAgg1(features, feat_dim, embed_dim, train_pos, adj_lists,
                      [intra1], inter="GNN", cuda=False, key=k_inter)

    combined, center_scores = model.forward(batch_nodes, labels, train_flag=True)
    jax.block_until_ready(combined)
    jax.block_until_ready(center_scores)

    assert combined.shape == (embed_dim, len(batch_nodes))
    assert center_scores.shape == (len(batch_nodes), 2)
    assert not np.isnan(np.asarray(combined)).any()
    assert not np.isnan(np.asarray(center_scores)).any()
    print("KERNEL_OK")
</pallas_src>

<mosaic_0001>
module attributes {stable_mosaic.version = 11 : i64} {
  func.func @_clf_kernel(%arg0: i32, %arg1: memref<32x32xf32, #tpu.memory_space<vmem>>, %arg2: memref<32x128xf32, #tpu.memory_space<vmem>>, %arg3: memref<1x128xf32, #tpu.memory_space<vmem>>, %arg4: memref<32x128xf32, #tpu.memory_space<vmem>>) attributes {dimension_semantics = [#tpu.dimension_semantics<parallel>], iteration_bounds = array<i64: 1>, scalar_prefetch = 0 : i64, scratch_operands = 0 : i64, tpu.core_type = #tpu.core_type<tc>, window_params = [{transform_indices = @transform_0, window_bounds = array<i64: 32, 32>}, {pipeline_mode = #tpu.pipeline_mode<synchronous>, transform_indices = @transform_1, window_bounds = array<i64: 32, 128>}, {pipeline_mode = #tpu.pipeline_mode<synchronous>, transform_indices = @transform_2, window_bounds = array<i64: 1, 128>}, {transform_indices = @transform_3, window_bounds = array<i64: 32, 128>}]} {
    %c0 = arith.constant 0 : index
    %c0_0 = arith.constant 0 : index
    %0 = vector.load %arg1[%c0, %c0_0] : memref<32x32xf32, #tpu.memory_space<vmem>>, vector<32x32xf32>
    %c0_1 = arith.constant 0 : index
    %c0_2 = arith.constant 0 : index
    %1 = vector.load %arg2[%c0_1, %c0_2] : memref<32x128xf32, #tpu.memory_space<vmem>>, vector<32x128xf32>
    %cst = arith.constant dense<0.000000e+00> : vector<32x128xf32>
    %2 = tpu.matmul %0, %1, %cst {dimension_numbers = #tpu.dot_dimension_numbers<[1], [0], [0], [1], [0, 0, 1, 1], [], []>} : vector<32x32xf32>, vector<32x128xf32>, vector<32x128xf32> -> vector<32x128xf32>
    %c0_3 = arith.constant 0 : index
    %c0_4 = arith.constant 0 : index
    %3 = vector.load %arg3[%c0_3, %c0_4] : memref<1x128xf32, #tpu.memory_space<vmem>>, vector<1x128xf32>
    %4 = vector.broadcast %3 : vector<1x128xf32> to vector<32x128xf32>
    %5 = arith.addf %2, %4 : vector<32x128xf32>
    %c0_5 = arith.constant 0 : index
    %c0_6 = arith.constant 0 : index
    %6 = vector.load %arg4[%c0_5, %c0_6] : memref<32x128xf32, #tpu.memory_space<vmem>>, vector<32x128xf32>
    tpu.vector_store %arg4[%c0_5, %c0_6], %5 {strides = array<i32>} : memref<32x128xf32, #tpu.memory_space<vmem>>, vector<32x128xf32>,
    return
  }
  func.func @transform_0(%arg0: i32) -> (i32, i32) {
    %c0_i32 = arith.constant 0 : i32
    %c0_i32_0 = arith.constant 0 : i32
    return %arg0, %c0_i32 : i32, i32
  }
  func.func @transform_1(%arg0: i32) -> (i32, i32) {
    %c0_i32 = arith.constant 0 : i32
    %c0_i32_0 = arith.constant 0 : i32
    %c0_i32_1 = arith.constant 0 : i32
    return %c0_i32, %c0_i32_0 : i32, i32
  }
  func.func @transform_2(%arg0: i32) -> (i32, i32) {
    %c0_i32 = arith.constant 0 : i32
    %c0_i32_0 = arith.constant 0 : i32
    %c0_i32_1 = arith.constant 0 : i32
    return %c0_i32, %c0_i32_0 : i32, i32
  }
  func.func @transform_3(%arg0: i32) -> (i32, i32) {
    %c0_i32 = arith.constant 0 : i32
    %c0_i32_0 = arith.constant 0 : i32
    return %arg0, %c0_i32 : i32, i32
  }
}

</mosaic_0001>

<llo_original>
// kernel: tpu_custom_call.1
$region0: #{tpu_custom_call.1}
  #allocation0 [shape = 'u32[]', space=smem, size = 0x4, offset = 0x4, fixed_abs, tag = 'smem constant byte address 0x4 - core index']
  #allocation1 [shape = 'u32[144,128]{1,0:T(1,128)}', space=vmem, size = 0x12000, scoped, tag = 'internal scratch']
  %s0 = inlined_call_operand.hbm [shape: f32[32,32], index: 0, kind: input, shape index: {}]
  %s1 = inlined_call_operand.hbm [shape: f32[32,128], index: 1, kind: input, shape index: {}]
  %s2 = inlined_call_operand.vmem [shape: f32[1,128], index: 2, kind: input, shape index: {}]
  %s3 = inlined_call_operand.hbm [shape: f32[32,128], index: 3, kind: output, shape index: {}]
  %s4 = sld [smem:[#allocation0]]
  $region30: #{tpu_custom_call.1} parent=0
    _
  %s6 = ssub.s32 1, %s4
  %s7 = scalar_select 0, %s6, %s4
  $region1: #{tpu_custom_call.1} parent=0
    #allocation2 [shape = 'u8[16384]{0}', space=vmem, size = 0x4000, scoped, tag = 'input window, operand 0, single buffered']
    #allocation3 [shape = 's32[1]{0}', space=sflag, size = 0x4, scoped, tag = 'scoped memory for tpu_custom_call.1']
    #allocation4 [shape = 's32[1]{0}', space=sflag, size = 0x4, scoped, tag = 'scoped memory for tpu_custom_call.1']
    #allocation5 [shape = 'u8[16384]{0}', space=vmem, size = 0x4000, scoped, tag = 'input window, operand 1, single buffered']
    #allocation6 [shape = 's32[1]{0}', space=sflag, size = 0x4, scoped, tag = 'scoped memory for tpu_custom_call.1']
    #allocation7 [shape = 'u8[16384]{0}', space=vmem, size = 0x4000, scoped, tag = 'output window, operand 0, single buffered']
    %8 = vsyncpa [#allocation3], 0
    %9 = vsyncpa [#allocation6], 0
    %10 = vsyncpa [#allocation4], 0
    // Predicated region
    $region2: #{tpu_custom_call.1} parent=1 // pred_check
      _
    $region3: #{tpu_custom_call.1} parent=1 // pred_check_branch
      %12 = sbr.rel (0) target = $region5
    $region4: #{tpu_custom_call.1} parent=1 // pred_region
      %s14 = ssub.s32 512, 512
      %15 = vsyncadd [#allocation3], %s14
      %s16 = sshll.u32 [#allocation2], 4
      %s17 = int_to_ptr.vmem [resolvable:$true] %s16
      %22 = dma.hbm_to_vmem [thread:$0]  %s0, 512, %s17, [#allocation3], 128, 128, 8
    $region5: #{tpu_custom_call.1} parent=1 // pred_fallthru
      _
    // Predicated region
    $region6: #{tpu_custom_call.1} parent=1 // pred_check
      _
    $region7: #{tpu_custom_call.1} parent=1 // pred_check_branch
      %24 = sbr.rel (0) target = $region9
    $region8: #{tpu_custom_call.1} parent=1 // pred_region
      %s26 = ssub.s32 512, 512
      %27 = vsyncadd [#allocation6], %s26
      %s28 = sshll.u32 [#allocation5], 4
      %s29 = int_to_ptr.vmem [resolvable:$true] %s28
      %34 = dma.hbm_to_vmem [thread:$0]  %s1, 512, %s29, [#allocation6], 128, 128, 8
    $region9: #{tpu_custom_call.1} parent=1 // pred_fallthru
      _
    // Predicated region
    $region10: #{tpu_custom_call.1} parent=1 // pred_check
      _
    $region11: #{tpu_custom_call.1} parent=1 // pred_check_branch
      %36 = sbr.rel (0) target = $region13
    $region12: #{tpu_custom_call.1} parent=1 // pred_region
      _
    $region13: #{tpu_custom_call.1} parent=1 // pred_fallthru
      _
    // Predicated region
    $region14: #{tpu_custom_call.1} parent=1 // pred_check
      _
    $region15: #{tpu_custom_call.1} parent=1 // pred_check_branch
      %38 = sbr.rel (0) target = $region17
    $region16: #{tpu_custom_call.1} parent=1 // pred_region
      %39 = dma.done [#allocation3], 512
    $region17: #{tpu_custom_call.1} parent=1 // pred_fallthru
      _
    // Predicated region
    $region18: #{tpu_custom_call.1} parent=1 // pred_check
      _
    $region19: #{tpu_custom_call.1} parent=1 // pred_check_branch
      %41 = sbr.rel (0) target = $region21
    $region20: #{tpu_custom_call.1} parent=1 // pred_region
      %42 = dma.done [#allocation6], 512
    $region21: #{tpu_custom_call.1} parent=1 // pred_fallthru
      _
    %v43 = vld [vmem:[#allocation2] sm:$0xff]
    %v44 = vld [vmem:[#allocation2 + $0x8] sm:$0xff]
    %v45 = vld [vmem:[#allocation2 + $0x10] sm:$0xff]
    %v46 = vld [vmem:[#allocation2 + $0x18] sm:$0xff]
    %v47 = vld [vmem:[#allocation5] sm:$0xff]
    %v48 = vld [vmem:[#allocation5 + $0x8] sm:$0xff]
    %v49 = vld [vmem:[#allocation5 + $0x10] sm:$0xff]
    %v50 = vld [vmem:[#allocation5 + $0x18] sm:$0xff]
    %v51 = vld [vmem:[%s2] sm:$0x1]
    %v53 = vlaneseq
    %v54 = vshrl.u32 %v53, 7
    %v55 = vsub.s32 0, %v54
    %v56 = vrot.slane %v51, %v55
    %vm58 = vcmask 261120
    %v60 = vsel %vm58, %v43, 0
    %v63 = vsel %vm58, %v44, 0
    %v66 = vsel %vm58, %v45, 0
    %v69 = vsel %vm58, %v46, 0
    %71 = vmatprep.subr.mxu0 0.0
    %72 = vmatpush1.msra.mxu0 0.0
    %73 = vmatprep.subr.mxu0 0.0
    %74 = vmatpush1.msra.mxu0 0.0
    %75 = vmatprep.subr.mxu0 0.0
    %76 = vmatpush1.msra.mxu0 0.0
    %77 = vmatprep.subr.mxu0 0.0
    %78 = vmatpush1.msra.mxu0 0.0
    %79 = vmatprep.subr.mxu0 0.0
    %80 = vmatpush1.msra.mxu0 0.0
    %81 = vmatprep.subr.mxu0 0.0
    %82 = vmatpush1.msra.mxu0 0.0
    %83 = vmatprep.subr.mxu0 0.0
    %84 = vmatpush1.msra.mxu0 0.0
    %85 = vmatprep.subr.mxu0 0.0
    %86 = vmatpush1.msra.mxu0 0.0
    %87 = vmatprep.subr.mxu0 0.0
    %88 = vmatpush1.msra.mxu0 0.0
    %89 = vmatprep.subr.mxu0 0.0
    %90 = vmatpush1.msra.mxu0 0.0
    %91 = vmatprep.subr.mxu0 0.0
    %92 = vmatpush1.msra.mxu0 0.0
    %93 = vmatprep.subr.mxu0 0.0
    %94 = vmatpush1.msra.mxu0 0.0
    %95 = vmatprep.subr.mxu0 0.0
    %96 = vmatpush1.msra.mxu0 %v50
    %97 = vmatprep.subr.mxu0 0.0
    %98 = vmatpush1.msra.mxu0 %v49
    %99 = vmatprep.subr.mxu0 0.0
    %100 = vmatpush1.msra.mxu0 %v48
    %101 = vmatprep.subr.mxu0 0.0
    %102 = vmatpush1.msra.mxu0 %v47
    %103 = vmatprep.subr.mxu0 0.0
    %104 = vmatpush2.msra.mxu0 0.0
    %105 = vmatprep.subr.mxu0 0.0
    %106 = vmatpush2.msra.mxu0 0.0
    %107 = vmatprep.subr.mxu0 0.0
    %108 = vmatpush2.msra.mxu0 0.0
    %109 = vmatprep.subr.mxu0 0.0
    %110 = vmatpush2.msra.mxu0 0.0
    %111 = vmatprep.subr.mxu0 0.0
    %112 = vmatpush2.msra.mxu0 0.0
    %113 = vmatprep.subr.mxu0 0.0
    %114 = vmatpush2.msra.mxu0 0.0
    %115 = vmatprep.subr.mxu0 0.0
    %116 = vmatpush2.msra.mxu0 0.0
    %117 = vmatprep.subr.mxu0 0.0
    %118 = vmatpush2.msra.mxu0 0.0
    %119 = vmatprep.subr.mxu0 0.0
    %120 = vmatpush2.msra.mxu0 0.0
    %121 = vmatprep.subr.mxu0 0.0
    %122 = vmatpush2.msra.mxu0 0.0
    %123 = vmatprep.subr.mxu0 0.0
    %124 = vmatpush2.msra.mxu0 0.0
    %125 = vmatprep.subr.mxu0 0.0
    %126 = vmatpush2.msra.mxu0 0.0
    %127 = vmatprep.subr.mxu0 0.0
    %128 = vmatpush2.msra.mxu0 0.0
    %129 = vmatprep.subr.mxu0 0.0
    %130 = vmatpush2.msra.mxu0 0.0
    %131 = vmatprep.subr.mxu0 0.0
    %132 = vmatpush2.msra.mxu0 0.0
    %133 = vmatprep.subr.mxu0 0.0
    %134 = vmatpush2.msra.mxu0 0.0
    %135 = vmatprep.mubr.f32.mxu0 0.0
    %136 = vmatmul.mubr.f32.gmra.mxu0 %v60
    %v137 = vpop.f32.mrf.mxu0
    %v138 = vadd.f32 %v56, %v137
    %v139 = vpop.f32.mrf.mxu0
    %140 = vmatprep.mubr.f32.mxu0 0.0
    %141 = vmatmul.mubr.f32.gmra.mxu0 %v63
    %v142 = vpop.f32.mrf.mxu0
    %v143 = vadd.f32 %v56, %v142
    %v144 = vpop.f32.mrf.mxu0
    %145 = vmatprep.mubr.f32.mxu0 0.0
    %146 = vmatmul.mubr.f32.gmra.mxu0 %v66
    %v147 = vpop.f32.mrf.mxu0
    %v148 = vadd.f32 %v56, %v147
    %v149 = vpop.f32.mrf.mxu0
    %150 = vmatprep.mubr.f32.mxu0 0.0
    %151 = vmatmul.mubr.f32.gmra.mxu0 %v69
    %v152 = vpop.f32.mrf.mxu0
    %v153 = vadd.f32 %v56, %v152
    %v154 = vpop.f32.mrf.mxu0
    %155 = vdwg.mxu0
    %156 = vst [vmem:[#allocation7] sm:$0xff] %v138
    %157 = vst [vmem:[#allocation7 + $0x8] sm:$0xff] %v143
    %158 = vst [vmem:[#allocation7 + $0x10] sm:$0xff] %v148
    %159 = vst [vmem:[#allocation7 + $0x18] sm:$0xff] %v153
    // Predicated region
    $region22: #{tpu_custom_call.1} parent=1 // pred_check
      _
    $region23: #{tpu_custom_call.1} parent=1 // pred_check_branch
      %161 = sbr.rel (0) target = $region25
    $region24: #{tpu_custom_call.1} parent=1 // pred_region
      %s163 = ssub.s32 512, 512
      %164 = vsyncadd [#allocation4], %s163
      %s165 = sshll.u32 [#allocation7], 4
      %s166 = int_to_ptr.vmem [resolvable:$true] %s165
      %171 = dma.vmem_to_hbm [thread:$0]  %s166, 512, %s3, [#allocation4], 128, 128, 8
    $region25: #{tpu_custom_call.1} parent=1 // pred_fallthru
      _
    // Predicated region
    $region26: #{tpu_custom_call.1} parent=1 // pred_check
      _
    $region27: #{tpu_custom_call.1} parent=1 // pred_check_branch
      %173 = sbr.rel (0) target = $region29
    $region28: #{tpu_custom_call.1} parent=1 // pred_region
      %174 = dma.done [#allocation4], 512
    $region29: #{tpu_custom_call.1} parent=1 // pred_fallthru
      _
    %175 = vsyncpa [#allocation3], 1
    %176 = vsyncpa [#allocation6], 1
    %177 = vsyncpa [#allocation4], 1

</llo_original>
